<compile_context>
chip_gen: v6e
topology: v6e:2x2x1
jax: 0.10.0
libtpu: 0.0.40
codegen_flags: <defaults>
</compile_context>

<pallas_src>
import functools

import jax
import jax.numpy as jnp
from jax import lax
from jax.experimental import pallas as pl
from jax.experimental.pallas import tpu as pltpu

HIDDEN = 512
NUM_HEADS = 8          # head_dim = 64 (only relevant through the seq-len-1 argument above)
BN_EPS = 1e-5
LANE = 128


def _round_up(a, m):
    return (a + m - 1) // m * m


def attention_block_kernel(x_ref, wx_ref, gamma_ref, beta_ref, wf_ref, bf_ref,
                           out_ref,
                           sum_ref, ssq_ref, scale_ref, shift_ref, *rest,
                           batch, use_stash):
    p = pl.program_id(0)        # 0: batch-statistics pass, 1: compute/write pass
    i = pl.program_id(1)        # batch-tile index
    nb = pl.num_programs(1)
    z_ref = rest[0] if use_stash else None

    @pl.when(p == 0)
    def _stats_pass():
        @pl.when(i == 0)
        def _():
            sum_ref[...] = jnp.zeros_like(sum_ref)
            ssq_ref[...] = jnp.zeros_like(ssq_ref)

        x = x_ref[...].astype(wx_ref.dtype)
        if use_stash:
            # Full [W1 | W_res] matmul; stash the result so pass 1 never touches x again.
            zm = jnp.dot(x, wx_ref[...], preferred_element_type=jnp.float32)
            z_ref[i] = zm
            h = zm[:, :HIDDEN]
        else:
            # Recompute fallback: stats pass only needs the HIDDEN columns (static 128-aligned slice).
            h = jnp.dot(x, wx_ref[:, :HIDDEN], preferred_element_type=jnp.float32)

        # Bias b1 was folded away (BN mean-subtraction), so zero-padded rows of x yield exactly-zero
        # rows of h and need no mask.  Variance uses E[h^2]-E[h]^2 on the bias-free pre-activations;
        # for extremely off-centered data a pilot-mean/Welford pass would be the robust upgrade.
        sum_ref[...] += jnp.sum(h, axis=0, keepdims=True)
        ssq_ref[...] += jnp.sum(h * h, axis=0, keepdims=True)

        @pl.when(i == nb - 1)
        def _():
            inv_n = 1.0 / batch
            mean = sum_ref[...] * inv_n
            var = ssq_ref[...] * inv_n - mean * mean          # biased var (PyTorch training BN)
            sc = gamma_ref[...] * lax.rsqrt(var + BN_EPS)
            scale_ref[...] = sc
            shift_ref[...] = beta_ref[...] - mean * sc

    @pl.when(p == 1)
    def _compute_pass():
        if use_stash:
            zm = z_ref[i]
        else:
            x = x_ref[...].astype(wx_ref.dtype)
            zm = jnp.dot(x, wx_ref[...], preferred_element_type=jnp.float32)
        h = zm[:, :HIDDEN]
        identity = zm[:, HIDDEN:]                               # x @ W_res^T (b_res folded into bf)
        hr = jnp.maximum(h * scale_ref[...] + shift_ref[...], 0.0)          # BN + ReLU
        # CrossAttention at seq-len 1 (+ output_proj), fused into a single matmul.
        y = jnp.dot(hr.astype(wf_ref.dtype), wf_ref[...],
                    preferred_element_type=jnp.float32) + bf_ref[...] + identity
        out_ref[...] = y.astype(out_ref.dtype)


def init_params(key, input_dim, output_dim):
    """Deterministic synthetic parameters in PyTorch layout: W is [out_features, in_features]."""
    ks = jax.random.split(key, 12)
    n = lambda k, shape, s=0.02: (s * jax.random.normal(k, shape, jnp.float32))
    return {
        "w1": n(ks[0], (HIDDEN, input_dim)),   "b1": n(ks[1], (HIDDEN,)),
        "gamma": jnp.ones((HIDDEN,), jnp.float32), "beta": jnp.zeros((HIDDEN,), jnp.float32),
        # CrossAttention params (Q/K created for shape fidelity; mathematically inert at seq=1)
        "wq": n(ks[2], (HIDDEN, HIDDEN)), "bq": n(ks[3], (HIDDEN,)),
        "wk": n(ks[4], (HIDDEN, HIDDEN)), "bk": n(ks[5], (HIDDEN,)),
        "wv": n(ks[6], (HIDDEN, HIDDEN)), "bv": n(ks[7], (HIDDEN,)),
        "wo": n(ks[8], (HIDDEN, HIDDEN)), "bo": n(ks[9], (HIDDEN,)),
        "wp": n(ks[10], (output_dim, HIDDEN)), "bp": jnp.zeros((output_dim,), jnp.float32),
        "w_res": n(ks[11], (output_dim, input_dim)), "b_res": jnp.zeros((output_dim,), jnp.float32),
    }


def prepare_params(params, weight_dtype=jnp.bfloat16):
    """One-time parameter prep (outside the hot path): transpose, fuse and lane-pad all weights.

    Fusions are computed in f32, then optionally cast (bf16 default: half the weight HBM/VMEM
    traffic, native MXU rate; the kernel accumulates in f32 via preferred_element_type).
    """
    out_dim = params["wp"].shape[0]
    out_pad = _round_up(out_dim, LANE)
    pad_c = out_pad - out_dim

    # x-side: a single matmul computes both self.linear and the residual Linear.
    # b1 is dropped (BatchNorm's mean subtraction cancels any constant shift of h exactly).
    wx = jnp.concatenate(
        [params["w1"].T, jnp.pad(params["w_res"].T, ((0, 0), (0, pad_c)))], axis=1)

    # CrossAttention at seq-len 1: softmax over one key == 1 exactly, so Q/K drop out and
    #   output_proj(out(v(h))) == h @ (Wv^T Wo^T Wp^T) + ((bv Wo^T + bo) Wp^T + bp)   (exact).
    wf = params["wv"].T @ params["wo"].T @ params["wp"].T
    bf = (params["bv"] @ params["wo"].T + params["bo"]) @ params["wp"].T + params["bp"]
    wf = jnp.pad(wf, ((0, 0), (0, pad_c)))
    bf = jnp.pad(bf + params["b_res"], (0, pad_c))[None, :]      # residual bias folded in

    return {
        "wx": wx.astype(weight_dtype),
        "gamma": params["gamma"][None, :].astype(jnp.float32),
        "beta": params["beta"][None, :].astype(jnp.float32),
        "wf": wf.astype(weight_dtype),
        "bf": bf.astype(jnp.float32),
        "out_dim": out_dim,
        "out_pad": out_pad,
    }


def attention_block(x, prep, out_dtype=jnp.float32, allow_stash=True):
    """Invoke the fused Pallas kernel on pre-prepared (transposed/fused/padded) params."""
    B, in_dim = x.shape
    out_pad = prep["out_pad"]
    zcols = HIDDEN + out_pad

    # ---- VMEM budget -> vmem_limit, tile size, z-stash decision -------------------------------
    try:
        phys_vmem = int(pltpu.get_tpu_info().vmem_capacity_bytes)
    except Exception:                              # conservative fallback (v7x-sized VMEM)
        phys_vmem = 64 * 1024 * 1024
    # ~48 MiB on v7x (64 MiB physical), 96 MiB on v5e/v6e (128 MiB physical).
    vmem_limit = min(phys_vmem * 3 // 4, 96 * 1024 * 1024)

    w_bytes = jnp.dtype(prep["wx"].dtype).itemsize
    x_bytes = x.dtype.itemsize
    o_bytes = jnp.dtype(out_dtype).itemsize
    # Constant-index weights are still double-buffered by the pipeline; budget for 2 copies.
    weight_resident = 2 * (in_dim * zcols * w_bytes + HIDDEN * out_pad * w_bytes
                           + (2 * HIDDEN + out_pad) * 4)
    # Per-row cost of one batch tile: double-buffered x and out tiles + in-kernel f32 temporaries.
    per_row = 2 * in_dim * x_bytes + 2 * out_pad * o_bytes + 2 * zcols * 4
    headroom = 2 * 1024 * 1024

    align = 16 if (x_bytes < 4 or o_bytes < 4) else 8            # sub-32-bit dtypes pack sublanes
    avail = max(vmem_limit - weight_resident - headroom, per_row * align)
    tile_b = max(align, min(1024, (avail // per_row) // align * align))
    tile_b = min(tile_b, _round_up(B, align))
    b_pad = _round_up(B, tile_b)
    nb = b_pad // tile_b

    # Stash the whole padded batch of pre-activations in VMEM when it fits -> pass 1 never
    # re-reads x from HBM nor re-runs the x-matmul.
    stash_bytes = b_pad * zcols * 4
    use_stash = bool(allow_stash and
                     (weight_resident + stash_bytes + tile_b * per_row + headroom) <= vmem_limit)

    if b_pad != B:
        x = jnp.pad(x, ((0, b_pad - B), (0, 0)))   # zero rows: contribute exactly 0 to BN stats

    resident = lambda shape: pl.BlockSpec(shape, lambda p, i: (0, 0))   # VMEM-resident weights
    if use_stash:
        # Pass 1 never reads x: pin its block to 0 so no extra x tiles are fetched after pass 0.
        x_spec = pl.BlockSpec((tile_b, in_dim), lambda p, i: (i * (1 - p), 0))
    else:
        x_spec = pl.BlockSpec((tile_b, in_dim), lambda p, i: (i, 0))

    scratch = [pltpu.VMEM((1, HIDDEN), jnp.float32)] * 4          # sum, sumsq, scale, shift
    if use_stash:
        scratch = scratch + [pltpu.VMEM((nb, tile_b, zcols), jnp.float32)]

    grid_spec = pltpu.PrefetchScalarGridSpec(
        num_scalar_prefetch=0,
        grid=(2, nb),                                             # (pass, batch tile)
        in_specs=[
            x_spec,
            resident((in_dim, zcols)),    # [W1 | W_res] fused, pre-transposed
            resident((1, HIDDEN)),        # gamma
            resident((1, HIDDEN)),        # beta
            resident((HIDDEN, out_pad)),  # Wv·Wo·Wp fused
            resident((1, out_pad)),       # fused attention/output (+ residual) bias
        ],
        # Pass 0 never advances (or writes) the output block -> no stale HBM writeback.
        out_specs=pl.BlockSpec((tile_b, out_pad), lambda p, i: (i * p, 0)),
        scratch_shapes=scratch,
    )

    if use_stash:
        flops = 2 * b_pad * in_dim * zcols + 2 * b_pad * HIDDEN * out_pad
        x_reads = 1
    else:
        flops = (2 * b_pad * in_dim * HIDDEN + 2 * b_pad * in_dim * zcols
                 + 2 * b_pad * HIDDEN * out_pad)
        x_reads = 2
    wbytes = sum(int(prep[k].size) * prep[k].dtype.itemsize
                 for k in ("wx", "gamma", "beta", "wf", "bf"))
    bytes_accessed = (x_reads * b_pad * in_dim * x_bytes + wbytes + b_pad * out_pad * o_bytes)

    kernel = functools.partial(attention_block_kernel, batch=B, use_stash=use_stash)

    y = pl.pallas_call(
        kernel,
        grid_spec=grid_spec,
        out_shape=jax.ShapeDtypeStruct((b_pad, out_pad), out_dtype),
        compiler_params=pltpu.CompilerParams(
            # Both axes sequential: pass 0 accumulates batch statistics across tiles (training-mode
            # BN couples the whole batch).  A v7x 2-TC split would require two pallas_calls.
            dimension_semantics=("arbitrary", "arbitrary"),
            vmem_limit_bytes=int(vmem_limit),
        ),
        cost_estimate=pl.CostEstimate(flops=flops, transcendentals=0,
                                      bytes_accessed=bytes_accessed),
    )(x, prep["wx"], prep["gamma"], prep["beta"], prep["wf"], prep["bf"])

    return y[:B, :prep["out_dim"]]


def reference(x, p):
    """Pure-JAX reference of the PyTorch forward (training-mode BN, full seq-len-1 attention)."""
    identity = x @ p["w_res"].T + p["b_res"]
    h = x @ p["w1"].T + p["b1"]
    mean = h.mean(0, keepdims=True)
    var = ((h - mean) ** 2).mean(0, keepdims=True)
    h = (h - mean) * lax.rsqrt(var + BN_EPS) * p["gamma"] + p["beta"]
    h = jnp.maximum(h, 0.0)
    B = x.shape[0]
    hd = HIDDEN // NUM_HEADS
    q = (h @ p["wq"].T + p["bq"]).reshape(B, NUM_HEADS, hd)
    k = (h @ p["wk"].T + p["bk"]).reshape(B, NUM_HEADS, hd)
    v = (h @ p["wv"].T + p["bv"]).reshape(B, NUM_HEADS, hd)
    scores = jnp.sum(q * k, axis=-1, keepdims=True) / (hd ** 0.5)      # (B, H, 1)
    attn = jax.nn.softmax(scores[..., None], axis=-1)                  # == 1.0
    o = (attn[..., 0] * v).reshape(B, HIDDEN)
    a = o @ p["wo"].T + p["bo"]
    y = a @ p["wp"].T + p["bp"]
    return y + identity


if __name__ == "__main__":
    B, INPUT_DIM, OUTPUT_DIM = 8, 32, 64

    key = jax.random.PRNGKey(0)
    kx, kp = jax.random.split(key)
    x = jax.random.normal(kx, (B, INPUT_DIM), jnp.float32)
    params = init_params(kp, INPUT_DIM, OUTPUT_DIM)

    ref = reference(x, params)

    # f32 weights: strict check against the PyTorch-semantics reference (stash path).
    prep32 = prepare_params(params, weight_dtype=jnp.float32)
    out32 = jax.block_until_ready(attention_block(x, prep32))
    assert out32.shape == (B, OUTPUT_DIM)
    err32 = float(jnp.max(jnp.abs(out32 - ref)))
    assert jnp.allclose(out32, ref, rtol=1e-4, atol=1e-4), err32

    # f32 weights, recompute fallback path (large-batch code path) — same strict check.
    out32_ns = jax.block_until_ready(attention_block(x, prep32, allow_stash=False))
    err32_ns = float(jnp.max(jnp.abs(out32_ns - ref)))
    assert jnp.allclose(out32_ns, ref, rtol=1e-4, atol=1e-4), err32_ns

    # bf16 weights (default) + bf16 output: halved weight/output HBM traffic, f32 accumulation.
    prep16 = prepare_params(params)
    out16 = jax.block_until_ready(attention_block(x, prep16, out_dtype=jnp.bfloat16))
    err16 = float(jnp.max(jnp.abs(out16.astype(jnp.float32) - ref)))
    assert err16 < 5e-2, err16

    print("KERNEL_OK")
</pallas_src>

<mosaic_0001>
module attributes {stable_mosaic.version = 11 : i64} {
  func.func @attention_block_kernel(%arg0: i32, %arg1: i32, %arg2: memref<8x32xf32, #tpu.memory_space<vmem>>, %arg3: memref<32x640xf32, #tpu.memory_space<vmem>>, %arg4: memref<1x512xf32, #tpu.memory_space<vmem>>, %arg5: memref<1x512xf32, #tpu.memory_space<vmem>>, %arg6: memref<512x128xf32, #tpu.memory_space<vmem>>, %arg7: memref<1x128xf32, #tpu.memory_space<vmem>>, %arg8: memref<8x128xf32, #tpu.memory_space<vmem>>, %arg9: memref<1x512xf32, #tpu.memory_space<vmem>>, %arg10: memref<1x512xf32, #tpu.memory_space<vmem>>, %arg11: memref<1x512xf32, #tpu.memory_space<vmem>>, %arg12: memref<1x512xf32, #tpu.memory_space<vmem>>, %arg13: memref<1x8x640xf32, #tpu.memory_space<vmem>>) attributes {dimension_semantics = [#tpu.dimension_semantics<arbitrary>, #tpu.dimension_semantics<arbitrary>], iteration_bounds = array<i64: 2, 1>, scalar_prefetch = 0 : i64, scratch_operands = 5 : i64, tpu.core_type = #tpu.core_type<tc>, window_params = [{transform_indices = @transform_0, window_bounds = array<i64: 8, 32>}, {pipeline_mode = #tpu.pipeline_mode<synchronous>, transform_indices = @transform_1, window_bounds = array<i64: 32, 640>}, {pipeline_mode = #tpu.pipeline_mode<synchronous>, transform_indices = @transform_2, window_bounds = array<i64: 1, 512>}, {pipeline_mode = #tpu.pipeline_mode<synchronous>, transform_indices = @transform_3, window_bounds = array<i64: 1, 512>}, {pipeline_mode = #tpu.pipeline_mode<synchronous>, transform_indices = @transform_4, window_bounds = array<i64: 512, 128>}, {pipeline_mode = #tpu.pipeline_mode<synchronous>, transform_indices = @transform_5, window_bounds = array<i64: 1, 128>}, {transform_indices = @transform_6, window_bounds = array<i64: 8, 128>}]} {
    %c0_i32 = arith.constant 0 : i32
    %0 = arith.cmpi eq, %arg0, %c0_i32 : i32
    %1 = arith.extui %0 : i1 to i32
    %c0_i32_0 = arith.constant 0 : i32
    %2 = arith.cmpi ne, %1, %c0_i32_0 : i32
    scf.if %2 {
      %c0_i32_2 = arith.constant 0 : i32
      %6 = arith.cmpi eq, %arg1, %c0_i32_2 : i32
      %7 = arith.extui %6 : i1 to i32
      %c0_i32_3 = arith.constant 0 : i32
      %8 = arith.cmpi ne, %7, %c0_i32_3 : i32
      scf.if %8 {
        %cst_21 = arith.constant 0.000000e+00 : f32
        %31 = vector.broadcast %cst_21 : f32 to vector<1x512xf32>
        %c0_22 = arith.constant 0 : index
        %c0_23 = arith.constant 0 : index
        %32 = vector.load %arg9[%c0_22, %c0_23] : memref<1x512xf32, #tpu.memory_space<vmem>>, vector<1x512xf32>
        tpu.vector_store %arg9[%c0_22, %c0_23], %31 {strides = array<i32>} : memref<1x512xf32, #tpu.memory_space<vmem>>, vector<1x512xf32>,
        %cst_24 = arith.constant 0.000000e+00 : f32
        %33 = vector.broadcast %cst_24 : f32 to vector<1x512xf32>
        %c0_25 = arith.constant 0 : index
        %c0_26 = arith.constant 0 : index
        %34 = vector.load %arg10[%c0_25, %c0_26] : memref<1x512xf32, #tpu.memory_space<vmem>>, vector<1x512xf32>
        tpu.vector_store %arg10[%c0_25, %c0_26], %33 {strides = array<i32>} : memref<1x512xf32, #tpu.memory_space<vmem>>, vector<1x512xf32>,
      } else {
      }
      %c0 = arith.constant 0 : index
      %c0_4 = arith.constant 0 : index
      %9 = vector.load %arg2[%c0, %c0_4] : memref<8x32xf32, #tpu.memory_space<vmem>>, vector<8x32xf32>
      %c0_5 = arith.constant 0 : index
      %c0_6 = arith.constant 0 : index
      %10 = vector.load %arg3[%c0_5, %c0_6] : memref<32x640xf32, #tpu.memory_space<vmem>>, vector<32x640xf32>
      %cst = arith.constant dense<0.000000e+00> : vector<8x640xf32>
      %11 = tpu.matmul %9, %10, %cst {dimension_numbers = #tpu.dot_dimension_numbers<[1], [0], [0], [1], [0, 0, 1, 1], [], []>} : vector<8x32xf32>, vector<32x640xf32>, vector<8x640xf32> -> vector<8x640xf32>
      %12 = arith.index_cast %arg1 : i32 to index
      %c0_7 = arith.constant 0 : index
      %c0_8 = arith.constant 0 : index
      %13 = vector.load %arg13[%12, %c0_7, %c0_8] : memref<1x8x640xf32, #tpu.memory_space<vmem>>, vector<1x8x640xf32>
      %14 = vector.shape_cast %13 : vector<1x8x640xf32> to vector<8x640xf32>
      %15 = vector.shape_cast %11 : vector<8x640xf32> to vector<1x8x640xf32>
      tpu.vector_store %arg13[%12, %c0_7, %c0_8], %15 {strides = array<i32>} : memref<1x8x640xf32, #tpu.memory_space<vmem>>, vector<1x8x640xf32>,
      %16 = vector.extract_strided_slice %11 {offsets = [0, 0], sizes = [8, 512], strides = [1, 1]} : vector<8x640xf32> to vector<8x512xf32>
      %c0_9 = arith.constant 0 : index
      %c0_10 = arith.constant 0 : index
      %17 = vector.load %arg9[%c0_9, %c0_10] : memref<1x512xf32, #tpu.memory_space<vmem>>, vector<1x512xf32>
      %cst_11 = arith.constant dense<0.000000e+00> : vector<512xf32>
      %18 = vector.multi_reduction <add>, %16, %cst_11 [0] : vector<8x512xf32> to vector<512xf32>
      %19 = vector.shape_cast %18 : vector<512xf32> to vector<1x512xf32>
      %20 = arith.addf %17, %19 : vector<1x512xf32>
      %c0_12 = arith.constant 0 : index
      %c0_13 = arith.constant 0 : index
      %21 = vector.load %arg9[%c0_12, %c0_13] : memref<1x512xf32, #tpu.memory_space<vmem>>, vector<1x512xf32>
      tpu.vector_store %arg9[%c0_12, %c0_13], %20 {strides = array<i32>} : memref<1x512xf32, #tpu.memory_space<vmem>>, vector<1x512xf32>,
      %c0_14 = arith.constant 0 : index
      %c0_15 = arith.constant 0 : index
      %22 = vector.load %arg10[%c0_14, %c0_15] : memref<1x512xf32, #tpu.memory_space<vmem>>, vector<1x512xf32>
      %23 = arith.mulf %16, %16 : vector<8x512xf32>
      %cst_16 = arith.constant dense<0.000000e+00> : vector<512xf32>
      %24 = vector.multi_reduction <add>, %23, %cst_16 [0] : vector<8x512xf32> to vector<512xf32>
      %25 = vector.shape_cast %24 : vector<512xf32> to vector<1x512xf32>
      %26 = arith.addf %22, %25 : vector<1x512xf32>
      %c0_17 = arith.constant 0 : index
      %c0_18 = arith.constant 0 : index
      %27 = vector.load %arg10[%c0_17, %c0_18] : memref<1x512xf32, #tpu.memory_space<vmem>>, vector<1x512xf32>
      tpu.vector_store %arg10[%c0_17, %c0_18], %26 {strides = array<i32>} : memref<1x512xf32, #tpu.memory_space<vmem>>, vector<1x512xf32>,
      %c0_i32_19 = arith.constant 0 : i32
      %28 = arith.cmpi eq, %arg1, %c0_i32_19 : i32
      %29 = arith.extui %28 : i1 to i32
      %c0_i32_20 = arith.constant 0 : i32
      %30 = arith.cmpi ne, %29, %c0_i32_20 : i32
      scf.if %30 {
        %c0_21 = arith.constant 0 : index
        %c0_22 = arith.constant 0 : index
        %31 = vector.load %arg9[%c0_21, %c0_22] : memref<1x512xf32, #tpu.memory_space<vmem>>, vector<1x512xf32>
        %cst_23 = arith.constant 1.250000e-01 : f32
        %32 = vector.broadcast %cst_23 : f32 to vector<1x512xf32>
        %33 = arith.mulf %31, %32 : vector<1x512xf32>
        %c0_24 = arith.constant 0 : index
        %c0_25 = arith.constant 0 : index
        %34 = vector.load %arg10[%c0_24, %c0_25] : memref<1x512xf32, #tpu.memory_space<vmem>>, vector<1x512xf32>
        %cst_26 = arith.constant 1.250000e-01 : f32
        %35 = vector.broadcast %cst_26 : f32 to vector<1x512xf32>
        %36 = arith.mulf %34, %35 : vector<1x512xf32>
        %37 = arith.mulf %33, %33 : vector<1x512xf32>
        %38 = arith.subf %36, %37 : vector<1x512xf32>
        %c0_27 = arith.constant 0 : index
        %c0_28 = arith.constant 0 : index
        %39 = vector.load %arg4[%c0_27, %c0_28] : memref<1x512xf32, #tpu.memory_space<vmem>>, vector<1x512xf32>
        %cst_29 = arith.constant 9.99999974E-6 : f32
        %40 = vector.broadcast %cst_29 : f32 to vector<1x512xf32>
        %41 = arith.addf %38, %40 : vector<1x512xf32>
        %42 = math.rsqrt %41 : vector<1x512xf32>
        %43 = arith.mulf %39, %42 : vector<1x512xf32>
        %c0_30 = arith.constant 0 : index
        %c0_31 = arith.constant 0 : index
        %44 = vector.load %arg11[%c0_30, %c0_31] : memref<1x512xf32, #tpu.memory_space<vmem>>, vector<1x512xf32>
        tpu.vector_store %arg11[%c0_30, %c0_31], %43 {strides = array<i32>} : memref<1x512xf32, #tpu.memory_space<vmem>>, vector<1x512xf32>,
        %c0_32 = arith.constant 0 : index
        %c0_33 = arith.constant 0 : index
        %45 = vector.load %arg5[%c0_32, %c0_33] : memref<1x512xf32, #tpu.memory_space<vmem>>, vector<1x512xf32>
        %46 = arith.mulf %33, %43 : vector<1x512xf32>
        %47 = arith.subf %45, %46 : vector<1x512xf32>
        %c0_34 = arith.constant 0 : index
        %c0_35 = arith.constant 0 : index
        %48 = vector.load %arg12[%c0_34, %c0_35] : memref<1x512xf32, #tpu.memory_space<vmem>>, vector<1x512xf32>
        tpu.vector_store %arg12[%c0_34, %c0_35], %47 {strides = array<i32>} : memref<1x512xf32, #tpu.memory_space<vmem>>, vector<1x512xf32>,
      } else {
      }
    } else {
    }
    %c1_i32 = arith.constant 1 : i32
    %3 = arith.cmpi eq, %arg0, %c1_i32 : i32
    %4 = arith.extui %3 : i1 to i32
    %c0_i32_1 = arith.constant 0 : i32
    %5 = arith.cmpi ne, %4, %c0_i32_1 : i32
    scf.if %5 {
      %6 = arith.index_cast %arg1 : i32 to index
      %c0 = arith.constant 0 : index
      %c0_2 = arith.constant 0 : index
      %7 = vector.load %arg13[%6, %c0, %c0_2] : memref<1x8x640xf32, #tpu.memory_space<vmem>>, vector<1x8x640xf32>
      %8 = vector.shape_cast %7 : vector<1x8x640xf32> to vector<8x640xf32>
      %9 = vector.extract_strided_slice %8 {offsets = [0, 0], sizes = [8, 512], strides = [1, 1]} : vector<8x640xf32> to vector<8x512xf32>
      %10 = vector.extract_strided_slice %8 {offsets = [0, 512], sizes = [8, 128], strides = [1, 1]} : vector<8x640xf32> to vector<8x128xf32>
      %c0_3 = arith.constant 0 : index
      %c0_4 = arith.constant 0 : index
      %11 = vector.load %arg11[%c0_3, %c0_4] : memref<1x512xf32, #tpu.memory_space<vmem>>, vector<1x512xf32>
      %12 = vector.broadcast %11 : vector<1x512xf32> to vector<8x512xf32>
      %13 = arith.mulf %9, %12 : vector<8x512xf32>
      %c0_5 = arith.constant 0 : index
      %c0_6 = arith.constant 0 : index
      %14 = vector.load %arg12[%c0_5, %c0_6] : memref<1x512xf32, #tpu.memory_space<vmem>>, vector<1x512xf32>
      %15 = vector.broadcast %14 : vector<1x512xf32> to vector<8x512xf32>
      %16 = arith.addf %13, %15 : vector<8x512xf32>
      %cst = arith.constant 0.000000e+00 : f32
      %17 = vector.broadcast %cst : f32 to vector<8x512xf32>
      %18 = arith.maximumf %16, %17 : vector<8x512xf32>
      %c0_7 = arith.constant 0 : index
      %c0_8 = arith.constant 0 : index
      %19 = vector.load %arg6[%c0_7, %c0_8] : memref<512x128xf32, #tpu.memory_space<vmem>>, vector<512x128xf32>
      %cst_9 = arith.constant dense<0.000000e+00> : vector<8x128xf32>
      %20 = tpu.matmul %18, %19, %cst_9 {dimension_numbers = #tpu.dot_dimension_numbers<[1], [0], [0], [1], [0, 0, 1, 1], [], []>} : vector<8x512xf32>, vector<512x128xf32>, vector<8x128xf32> -> vector<8x128xf32>
      %c0_10 = arith.constant 0 : index
      %c0_11 = arith.constant 0 : index
      %21 = vector.load %arg7[%c0_10, %c0_11] : memref<1x128xf32, #tpu.memory_space<vmem>>, vector<1x128xf32>
      %22 = vector.broadcast %21 : vector<1x128xf32> to vector<8x128xf32>
      %23 = arith.addf %20, %22 : vector<8x128xf32>
      %24 = arith.addf %23, %10 : vector<8x128xf32>
      %c0_12 = arith.constant 0 : index
      %c0_13 = arith.constant 0 : index
      %25 = vector.load %arg8[%c0_12, %c0_13] : memref<8x128xf32, #tpu.memory_space<vmem>>, vector<8x128xf32>
      tpu.vector_store %arg8[%c0_12, %c0_13], %24 {strides = array<i32>} : memref<8x128xf32, #tpu.memory_space<vmem>>, vector<8x128xf32>,
    } else {
    }
    return
  }
  func.func @transform_0(%arg0: i32, %arg1: i32) -> (i32, i32) {
    %c1_i32 = arith.constant 1 : i32
    %0 = arith.subi %c1_i32, %arg0 : i32
    %1 = arith.muli %arg1, %0 : i32
    %c0_i32 = arith.constant 0 : i32
    %c0_i32_0 = arith.constant 0 : i32
    return %1, %c0_i32 : i32, i32
  }
  func.func @transform_1(%arg0: i32, %arg1: i32) -> (i32, i32) {
    %c0_i32 = arith.constant 0 : i32
    %c0_i32_0 = arith.constant 0 : i32
    %c0_i32_1 = arith.constant 0 : i32
    return %c0_i32, %c0_i32_0 : i32, i32
  }
  func.func @transform_2(%arg0: i32, %arg1: i32) -> (i32, i32) {
    %c0_i32 = arith.constant 0 : i32
    %c0_i32_0 = arith.constant 0 : i32
    %c0_i32_1 = arith.constant 0 : i32
    return %c0_i32, %c0_i32_0 : i32, i32
  }
  func.func @transform_3(%arg0: i32, %arg1: i32) -> (i32, i32) {
    %c0_i32 = arith.constant 0 : i32
    %c0_i32_0 = arith.constant 0 : i32
    %c0_i32_1 = arith.constant 0 : i32
    return %c0_i32, %c0_i32_0 : i32, i32
  }
  func.func @transform_4(%arg0: i32, %arg1: i32) -> (i32, i32) {
    %c0_i32 = arith.constant 0 : i32
    %c0_i32_0 = arith.constant 0 : i32
    %c0_i32_1 = arith.constant 0 : i32
    return %c0_i32, %c0_i32_0 : i32, i32
  }
  func.func @transform_5(%arg0: i32, %arg1: i32) -> (i32, i32) {
    %c0_i32 = arith.constant 0 : i32
    %c0_i32_0 = arith.constant 0 : i32
    %c0_i32_1 = arith.constant 0 : i32
    return %c0_i32, %c0_i32_0 : i32, i32
  }
  func.func @transform_6(%arg0: i32, %arg1: i32) -> (i32, i32) {
    %0 = arith.muli %arg1, %arg0 : i32
    %c0_i32 = arith.constant 0 : i32
    %c0_i32_0 = arith.constant 0 : i32
    return %0, %c0_i32 : i32, i32
  }
}

</mosaic_0001>

<llo_original>
// kernel: tpu_custom_call.1
$region0: #{tpu_custom_call.1}
  #allocation0 [shape = 'u32[]', space=smem, size = 0x4, offset = 0x4, fixed_abs, tag = 'smem constant byte address 0x4 - core index']
  #allocation1 [shape = 'u32[144,128]{1,0:T(1,128)}', space=vmem, size = 0x12000, scoped, tag = 'internal scratch']
  #allocation2 [shape = 'f32[1,512]{1,0:T(1,128)}', space=vmem, size = 0x800, scoped, tag = 'scratch operand']
  #allocation3 [shape = 'f32[1,512]{1,0:T(1,128)}', space=vmem, size = 0x800, scoped, tag = 'scratch operand']
  #allocation4 [shape = 'f32[1,512]{1,0:T(1,128)}', space=vmem, size = 0x800, scoped, tag = 'scratch operand']
  #allocation5 [shape = 'f32[1,512]{1,0:T(1,128)}', space=vmem, size = 0x800, scoped, tag = 'scratch operand']
  #allocation6 [shape = 'f32[1,8,640]{2,1,0:T(8,128)}', space=vmem, size = 0x5000, scoped, tag = 'scratch operand']
  %s0 = inlined_call_operand.hbm [shape: f32[8,32], index: 0, kind: input, shape index: {}]
  %s1 = inlined_call_operand.hbm [shape: f32[32,640], index: 1, kind: input, shape index: {}]
  %s2 = inlined_call_operand.hbm [shape: f32[1,512], index: 2, kind: input, shape index: {}]
  %s3 = inlined_call_operand.vmem [shape: f32[1,512], index: 3, kind: input, shape index: {}]
  %s4 = inlined_call_operand.hbm [shape: f32[512,128], index: 4, kind: input, shape index: {}]
  %s5 = inlined_call_operand.vmem [shape: f32[1,128], index: 5, kind: input, shape index: {}]
  %s6 = inlined_call_operand.hbm [shape: f32[8,128], index: 6, kind: output, shape index: {}]
  %s7 = sld [smem:[#allocation0]]
  $region89: #{tpu_custom_call.1} parent=0
    _
  %s9 = ssub.s32 1, %s7
  %s10 = scalar_select 0, %s9, %s7
  $region1: #{tpu_custom_call.1} parent=0
    #allocation7 [shape = 'u8[8192]{0}', space=vmem, size = 0x2000, scoped, tag = 'input window, operand 0']
    #allocation8 [shape = 's32[2]{0}', space=sflag, size = 0x8, scoped, tag = 'scoped memory for tpu_custom_call.1']
    #allocation9 [shape = 's32[2]{0}', space=sflag, size = 0x8, scoped, tag = 'scoped memory for tpu_custom_call.1']
    #allocation10 [shape = 'u8[81920]{0}', space=vmem, size = 0x14000, scoped, tag = 'input window, operand 1, single buffered']
    #allocation11 [shape = 's32[1]{0}', space=sflag, size = 0x4, scoped, tag = 'scoped memory for tpu_custom_call.1']
    #allocation12 [shape = 'u8[2048]{0}', space=vmem, size = 0x800, scoped, tag = 'input window, operand 2, single buffered']
    #allocation13 [shape = 'u8[262144]{0}', space=vmem, size = 0x40000, scoped, tag = 'input window, operand 4, single buffered']
    #allocation14 [shape = 's32[1]{0}', space=sflag, size = 0x4, scoped, tag = 'scoped memory for tpu_custom_call.1']
    #allocation15 [shape = 'u8[8192]{0}', space=vmem, size = 0x2000, scoped, tag = 'output window, operand 0']
    %11 = vsyncpa [#allocation8], 0
    %s12 = scalar_lea.sflag [#allocation8], 1
    %13 = vsyncpa %s12, 0
    %14 = vsyncpa [#allocation11], 0
    %15 = vsyncpa [#allocation14], 0
    %16 = vsyncpa [#allocation9], 0
    %s17 = scalar_lea.sflag [#allocation9], 1
    %18 = vsyncpa %s17, 0
    loop: start=0, step=1, limit=4
    $region2: #{tpu_custom_call.1} parent=1 // loop_pre_header
      _
    $region3: #{tpu_custom_call.1} parent=1 // loop_header
      %s20 = sphi 0, %s24
      %p21 = scmp.ge.s32.totalorder %s20, 4
      %s27 = sphi 0, %s39
      %s28 = sphi 0, %s35
      %s29 = sphi 0, %s27
      %s30 = sphi 0, %s28
      %s31 = sphi 0, %s29
      %s32 = sphi 0, %s30
      %s46 = sphi 0, %s48
      %s49 = sphi 0, %s46
      %s50 = sphi 0, %s49
      %s66 = sphi 0, %s50
      %s70 = sphi 0, %s70
      %s72 = sphi 0, %s70
      %s73 = sphi 0, %s72
      %s87 = sphi 0, %s73
      %s91 = sphi 0, %s91
      %s93 = sphi 0, %s91
      %s94 = sphi 0, %s93
      %s108 = sphi 0, %s94
      %s112 = sphi 0, %s112
      %s114 = sphi 0, %s112
      %s115 = sphi 0, %s114
      %s129 = sphi 0, %s115
      %s133 = sphi 0, %s133
      %s135 = sphi 0, %s133
      %s136 = sphi 0, %s135
      %s150 = sphi 0, %s136
      %s154 = sphi 0, %s154
      %s156 = sphi 0, %s154
      %s157 = sphi 0, %s156
      %s171 = sphi 0, %s157
      %s179 = sphi 0, %s181
      %s182 = sphi 0, %s179
      %s183 = sphi 0, %s182
      %s199 = sphi 0, %s183
    $region4: #{tpu_custom_call.1} parent=1 // loop_header_branch
      %23 = sbr.rel (%p21) target = $region8
    $region5: #{tpu_custom_call.1} parent=1 // loop_body
      %s25 = ssub.s32 %s20, 1
      %s26 = ssub.s32 %s20, 2
      %s33 = sadd.s32 1, %s28
      %p34 = scmp.ge.s32.totalorder %s33, 1
      %s35 = scalar_select %p34, 0, %s33
      %s36 = sadd.s32 1, %s27
      %s37 = scalar_select %p34, %s36, %s27
      %p38 = scmp.ge.s32.totalorder %s37, 2
      %s39 = scalar_select %p38, 0, %s37
      %s40 = ssub.s32 1, %s27
      %s41 = smul.u32 %s28, %s40
      %s42 = ssub.s32 1, %s39
      %s43 = smul.u32 %s35, %s42
      %s44 = ssub.s32 %s41, %s43
      %p45 = scmp.eq.s32.totalorder %s44, 0
      %s47 = sadd.s32 %s46, 1
      %s48 = scalar_select %p45, %s46, %s47
      %p51 = pneg %p45
      %p52 = scmp.eq.s32.totalorder %s20, 1
      %p53 = por %p51, %p52
      %p54 = scmp.ne.s32.totalorder %s46, %s49
      %p55 = scmp.eq.s32.totalorder %s20, 0
      %p56 = por %p54, %p55
      %p57 = scmp.ne.s32.totalorder %s46, %s49
      %p58 = scmp.eq.s32.totalorder %s25, 1
      %p59 = por %p57, %p58
      %p60 = scmp.ne.s32.totalorder %s49, %s50
      %p61 = scmp.eq.s32.totalorder %s25, 0
      %p62 = por %p60, %p61
      %p63 = scmp.ne.s32.totalorder %s49, %s50
      %p64 = scmp.eq.s32.totalorder %s26, 1
      %p65 = por %p63, %p64
      %p67 = scmp.ne.s32.totalorder %s50, %s66
      %p68 = scmp.eq.s32.totalorder %s26, 0
      %p69 = por %p67, %p68
      %s71 = sadd.s32 %s70, 1
      %p74 = scmp.eq.s32.totalorder %s20, 1
      %p75 = scmp.ne.s32.totalorder %s70, %s72
      %p76 = scmp.eq.s32.totalorder %s20, 0
      %p77 = por %p75, %p76
      %p78 = scmp.ne.s32.totalorder %s70, %s72
      %p79 = scmp.eq.s32.totalorder %s25, 1
      %p80 = por %p78, %p79
      %p81 = scmp.ne.s32.totalorder %s72, %s73
      %p82 = scmp.eq.s32.totalorder %s25, 0
      %p83 = por %p81, %p82
      %p84 = scmp.ne.s32.totalorder %s72, %s73
      %p85 = scmp.eq.s32.totalorder %s26, 1
      %p86 = por %p84, %p85
      %p88 = scmp.ne.s32.totalorder %s73, %s87
      %p89 = scmp.eq.s32.totalorder %s26, 0
      %p90 = por %p88, %p89
      %s92 = sadd.s32 %s91, 1
      %p95 = scmp.eq.s32.totalorder %s20, 1
      %p96 = scmp.ne.s32.totalorder %s91, %s93
      %p97 = scmp.eq.s32.totalorder %s20, 0
      %p98 = por %p96, %p97
      %p99 = scmp.ne.s32.totalorder %s91, %s93
      %p100 = scmp.eq.s32.totalorder %s25, 1
      %p101 = por %p99, %p100
      %p102 = scmp.ne.s32.totalorder %s93, %s94
      %p103 = scmp.eq.s32.totalorder %s25, 0
      %p104 = por %p102, %p103
      %p105 = scmp.ne.s32.totalorder %s93, %s94
      %p106 = scmp.eq.s32.totalorder %s26, 1
      %p107 = por %p105, %p106
      %p109 = scmp.ne.s32.totalorder %s94, %s108
      %p110 = scmp.eq.s32.totalorder %s26, 0
      %p111 = por %p109, %p110
      %s113 = sadd.s32 %s112, 1
      %p116 = scmp.eq.s32.totalorder %s20, 1
      %p117 = scmp.ne.s32.totalorder %s112, %s114
      %p118 = scmp.eq.s32.totalorder %s20, 0
      %p119 = por %p117, %p118
      %p120 = scmp.ne.s32.totalorder %s112, %s114
      %p121 = scmp.eq.s32.totalorder %s25, 1
      %p122 = por %p120, %p121
      %p123 = scmp.ne.s32.totalorder %s114, %s115
      %p124 = scmp.eq.s32.totalorder %s25, 0
      %p125 = por %p123, %p124
      %p126 = scmp.ne.s32.totalorder %s114, %s115
      %p127 = scmp.eq.s32.totalorder %s26, 1
      %p128 = por %p126, %p127
      %p130 = scmp.ne.s32.totalorder %s115, %s129
      %p131 = scmp.eq.s32.totalorder %s26, 0
      %p132 = por %p130, %p131
      %s134 = sadd.s32 %s133, 1
      %p137 = scmp.eq.s32.totalorder %s20, 1
      %p138 = scmp.ne.s32.totalorder %s133, %s135
      %p139 = scmp.eq.s32.totalorder %s20, 0
      %p140 = por %p138, %p139
      %p141 = scmp.ne.s32.totalorder %s133, %s135
      %p142 = scmp.eq.s32.totalorder %s25, 1
      %p143 = por %p141, %p142
      %p144 = scmp.ne.s32.totalorder %s135, %s136
      %p145 = scmp.eq.s32.totalorder %s25, 0
      %p146 = por %p144, %p145
      %p147 = scmp.ne.s32.totalorder %s135, %s136
      %p148 = scmp.eq.s32.totalorder %s26, 1
      %p149 = por %p147, %p148
      %p151 = scmp.ne.s32.totalorder %s136, %s150
      %p152 = scmp.eq.s32.totalorder %s26, 0
      %p153 = por %p151, %p152
      %s155 = sadd.s32 %s154, 1
      %p158 = scmp.eq.s32.totalorder %s20, 1
      %p159 = scmp.ne.s32.totalorder %s154, %s156
      %p160 = scmp.eq.s32.totalorder %s20, 0
      %p161 = por %p159, %p160
      %p162 = scmp.ne.s32.totalorder %s154, %s156
      %p163 = scmp.eq.s32.totalorder %s25, 1
      %p164 = por %p162, %p163
      %p165 = scmp.ne.s32.totalorder %s156, %s157
      %p166 = scmp.eq.s32.totalorder %s25, 0
      %p167 = por %p165, %p166
      %p168 = scmp.ne.s32.totalorder %s156, %s157
      %p169 = scmp.eq.s32.totalorder %s26, 1
      %p170 = por %p168, %p169
      %p172 = scmp.ne.s32.totalorder %s157, %s171
      %p173 = scmp.eq.s32.totalorder %s26, 0
      %p174 = por %p172, %p173
      %s175 = smul.u32 %s28, %s27
      %s176 = smul.u32 %s35, %s39
      %s177 = ssub.s32 %s175, %s176
      %p178 = scmp.eq.s32.totalorder %s177, 0
      %s180 = sadd.s32 %s179, 1
      %s181 = scalar_select %p178, %s179, %s180
      %p184 = pneg %p178
      %p185 = scmp.eq.s32.totalorder %s20, 1
      %p186 = por %p184, %p185
      %p187 = scmp.ne.s32.totalorder %s179, %s182
      %p188 = scmp.eq.s32.totalorder %s20, 0
      %p189 = por %p187, %p188
      %p190 = scmp.ne.s32.totalorder %s179, %s182
      %p191 = scmp.eq.s32.totalorder %s25, 1
      %p192 = por %p190, %p191
      %p193 = scmp.ne.s32.totalorder %s182, %s183
      %p194 = scmp.eq.s32.totalorder %s25, 0
      %p195 = por %p193, %p194
      %p196 = scmp.ne.s32.totalorder %s182, %s183
      %p197 = scmp.eq.s32.totalorder %s26, 1
      %p198 = por %p196, %p197
      %p200 = scmp.ne.s32.totalorder %s183, %s199
      %p201 = scmp.eq.s32.totalorder %s26, 0
      %p202 = por %p200, %p201
      %p203 = scmp.le.s32.totalorder 1, %s20
      %p204 = scmp.lt.s32.totalorder %s20, 3
      %p205 = pnand %p203, %p204
      %p206 = pneg %p205
      // Predicated region
      $region9: #{tpu_custom_call.1} parent=5 // pred_check
        _
      $region10: #{tpu_custom_call.1} parent=5 // pred_check_branch
        %208 = sbr.rel (%p205) target = $region12
      $region11: #{tpu_custom_call.1} parent=5 // pred_region
        %s209 = ssub.s32 %s20, 1
        // Predicated region
        $region13: #{tpu_custom_call.1} parent=11 // pred_check
          %p210 = pneg %p83
        $region14: #{tpu_custom_call.1} parent=11 // pred_check_branch
          %212 = sbr.rel (%p210) target = $region16
        $region15: #{tpu_custom_call.1} parent=11 // pred_region
          %s214 = ssub.s32 2560, 2560
          %215 = vsyncadd [#allocation11], %s214
          %s216 = sshll.u32 [#allocation10], 4
          %s217 = int_to_ptr.vmem [resolvable:$true] %s216
          %222 = dma.hbm_to_vmem [thread:$0]  %s1, 2560, %s217, [#allocation11], 640, 640, 40
        $region16: #{tpu_custom_call.1} parent=11 // pred_fallthru
          _
        // Predicated region
        $region17: #{tpu_custom_call.1} parent=11 // pred_check
          %p223 = pneg %p104
        $region18: #{tpu_custom_call.1} parent=11 // pred_check_branch
          %225 = sbr.rel (%p223) target = $region20
        $region19: #{tpu_custom_call.1} parent=11 // pred_region
          %s227 = ssub.s32 64, 64
          %228 = vsyncadd [#allocation11], %s227
          %s230 = sshll.u32 [#allocation12], 4
          %s231 = int_to_ptr.vmem [resolvable:$true] %s230
          %233 = dma.hbm_to_vmem [thread:$0]  %s2, 64, %s231, [#allocation11]
        $region20: #{tpu_custom_call.1} parent=11 // pred_fallthru
          _
        // Predicated region
        $region21: #{tpu_custom_call.1} parent=11 // pred_check
          %p234 = pneg %p125
        $region22: #{tpu_custom_call.1} parent=11 // pred_check_branch
          %236 = sbr.rel (%p234) target = $region24
        $region23: #{tpu_custom_call.1} parent=11 // pred_region
          _
        $region24: #{tpu_custom_call.1} parent=11 // pred_fallthru
          _
        // Predicated region
        $region25: #{tpu_custom_call.1} parent=11 // pred_check
          %p237 = pneg %p146
        $region26: #{tpu_custom_call.1} parent=11 // pred_check_branch
          %239 = sbr.rel (%p237) target = $region28
        $region27: #{tpu_custom_call.1} parent=11 // pred_region
          %s241 = ssub.s32 8192, 8192
          %242 = vsyncadd [#allocation14], %s241
          %s243 = sshll.u32 [#allocation13], 4
          %s244 = int_to_ptr.vmem [resolvable:$true] %s243
          %249 = dma.hbm_to_vmem [thread:$0]  %s4, 8192, %s244, [#allocation14], 128, 128, 8
        $region28: #{tpu_custom_call.1} parent=11 // pred_fallthru
          _
        // Predicated region
        $region29: #{tpu_custom_call.1} parent=11 // pred_check
          %p250 = pneg %p167
        $region30: #{tpu_custom_call.1} parent=11 // pred_check_branch
          %252 = sbr.rel (%p250) target = $region32
        $region31: #{tpu_custom_call.1} parent=11 // pred_region
          _
        $region32: #{tpu_custom_call.1} parent=11 // pred_fallthru
          _
      $region12: #{tpu_custom_call.1} parent=5 // pred_fallthru
        _
      %p253 = scmp.lt.s32.totalorder %s20, 2
      // Predicated region
      $region33: #{tpu_custom_call.1} parent=5 // pred_check
        %p254 = pneg %p253
      $region34: #{tpu_custom_call.1} parent=5 // pred_check_branch
        %256 = sbr.rel (%p254) target = $region36
      $region35: #{tpu_custom_call.1} parent=5 // pred_region
        // Predicated region
        $region37: #{tpu_custom_call.1} parent=35 // pred_check
          %p257 = pneg %p56
        $region38: #{tpu_custom_call.1} parent=35 // pred_check_branch
          %259 = sbr.rel (%p257) target = $region40
        $region39: #{tpu_custom_call.1} parent=35 // pred_region
          %s260 = sand.u32 %s46, 1
          %s261 = scalar_lea.sflag [#allocation8], %s260
          %s262 = sand.u32 %s46, 1
          %s263 = smul.addr %s262, 8
          %s264 = scalar_lea.vmem [#allocation7], %s263
          %s265 = ssub.s32 1, %s27
          %s266 = smul.u32 %s28, %s265
          %s268 = ssub.s32 128, 128
          %269 = vsyncadd %s261, %s268
          %s270 = smul.addr %s266, 128
          %s271 = scalar_lea.hbm %s0, %s270
          %s273 = sshll.u32 %s264, 4
          %s274 = int_to_ptr.vmem [resolvable:$true] %s273
          %276 = dma.hbm_to_vmem [thread:$0]  %s271, 128, %s274, %s261
        $region40: #{tpu_custom_call.1} parent=35 // pred_fallthru
          _
      $region36: #{tpu_custom_call.1} parent=5 // pred_fallthru
        _
      %p277 = scmp.le.s32.totalorder 1, %s20
      %p278 = scmp.lt.s32.totalorder %s20, 3
      %p279 = pnand %p277, %p278
      %p280 = pneg %p279
      // Predicated region
      $region41: #{tpu_custom_call.1} parent=5 // pred_check
        _
      $region42: #{tpu_custom_call.1} parent=5 // pred_check_branch
        %282 = sbr.rel (%p279) target = $region44
      $region43: #{tpu_custom_call.1} parent=5 // pred_region
        %s283 = ssub.s32 %s20, 1
        %s284 = sand.u32 %s49, 1
        %s285 = scalar_lea.sflag [#allocation8], %s284
        %s286 = sand.u32 %s49, 1
        %s287 = smul.addr %s286, 8
        %s288 = scalar_lea.vmem [#allocation7], %s287
        // Predicated region
        $region45: #{tpu_custom_call.1} parent=43 // pred_check
          %p289 = pneg %p62
        $region46: #{tpu_custom_call.1} parent=43 // pred_check_branch
          %291 = sbr.rel (%p289) target = $region48
        $region47: #{tpu_custom_call.1} parent=43 // pred_region
          %292 = dma.done %s285, 128
        $region48: #{tpu_custom_call.1} parent=43 // pred_fallthru
          _
        // Predicated region
        $region49: #{tpu_custom_call.1} parent=43 // pred_check
          %p293 = pneg %p83
        $region50: #{tpu_custom_call.1} parent=43 // pred_check_branch
          %295 = sbr.rel (%p293) target = $region52
        $region51: #{tpu_custom_call.1} parent=43 // pred_region
          %296 = dma.done [#allocation11], 2560
        $region52: #{tpu_custom_call.1} parent=43 // pred_fallthru
          _
        // Predicated region
        $region53: #{tpu_custom_call.1} parent=43 // pred_check
          %p297 = pneg %p104
        $region54: #{tpu_custom_call.1} parent=43 // pred_check_branch
          %299 = sbr.rel (%p297) target = $region56
        $region55: #{tpu_custom_call.1} parent=43 // pred_region
          %300 = dma.done [#allocation11], 64
        $region56: #{tpu_custom_call.1} parent=43 // pred_fallthru
          _
        // Predicated region
        $region57: #{tpu_custom_call.1} parent=43 // pred_check
          %p301 = pneg %p146
        $region58: #{tpu_custom_call.1} parent=43 // pred_check_branch
          %303 = sbr.rel (%p301) target = $region60
        $region59: #{tpu_custom_call.1} parent=43 // pred_region
          %304 = dma.done [#allocation14], 8192
        $region60: #{tpu_custom_call.1} parent=43 // pred_fallthru
          _
        %s305 = sand.u32 %s49, 1
        %s306 = scalar_lea.sflag [#allocation8], %s305
        %s307 = sand.u32 %s49, 1
        %s308 = smul.addr %s307, 8
        %s309 = scalar_lea.vmem [#allocation7], %s308
        %p310 = pneg %p62
        %p311 = pneg %p59
        %p312 = pneg %p83
        %p313 = pneg %p80
        %p314 = pneg %p104
        %p315 = pneg %p101
        %p316 = pneg %p125
        %p317 = pneg %p122
        %p318 = pneg %p146
        %p319 = pneg %p143
        %p320 = pneg %p167
        %p321 = pneg %p164
        %p322 = pneg %p195
        %p323 = pneg %p192
        %s324 = sand.u32 %s182, 1
        %s325 = scalar_lea.sflag [#allocation9], %s324
        %s326 = sand.u32 %s182, 1
        %s327 = smul.addr %s326, 8
        %s328 = scalar_lea.vmem [#allocation15], %s327
        %s329 = ssub.s32 1, %s29
        %s330 = smul.u32 %s30, %s329
        %s331 = smul.u32 %s30, %s29
        %p332 = scmp.eq.s32.totalorder %s29, 0
        // Predicated region
        $region61: #{tpu_custom_call.1} parent=43 // pred_check
          %p333 = pneg %p332
        $region62: #{tpu_custom_call.1} parent=43 // pred_check_branch
          %335 = sbr.rel (%p333) target = $region64
        $region63: #{tpu_custom_call.1} parent=43 // pred_region
          %p336 = scmp.eq.s32.totalorder %s30, 0
          // Predicated region
          $region65: #{tpu_custom_call.1} parent=63 // pred_check
            %p337 = pneg %p336
          $region66: #{tpu_custom_call.1} parent=63 // pred_check_branch
            %339 = sbr.rel (%p337) target = $region68
          $region67: #{tpu_custom_call.1} parent=63 // pred_region
            %v340 = vlaneseq
            %vm341 = vcmp.ge.s32.totalorder %v340, 0
            %vm342 = vcmp.lt.s32.totalorder %v340, 512
            %vm343 = vmand %vm341, %vm342
            %344 = vst.msk [vmem:[#allocation2] sm:$0xf] %vm343, 0.0
            %345 = vst.msk [vmem:[#allocation3] sm:$0xf] %vm343, 0.0
          $region68: #{tpu_custom_call.1} parent=63 // pred_fallthru
            _
          %v346 = vld [vmem:[%s288] sm:$0xff]
          %v347 = vld [vmem:[#allocation10] sm:$0xff]
          %v348 = vld [vmem:[#allocation10 + $0x8] sm:$0xff]
          %v349 = vld [vmem:[#allocation10 + $0x10] sm:$0xff]
          %v350 = vld [vmem:[#allocation10 + $0x18] sm:$0xff]
          %v351 = vld [vmem:[#allocation10 + $0x20] sm:$0xff]
          %v352 = vld [vmem:[#allocation10 + $0x28] sm:$0xff]
          %v353 = vld [vmem:[#allocation10 + $0x30] sm:$0xff]
          %v354 = vld [vmem:[#allocation10 + $0x38] sm:$0xff]
          %v355 = vld [vmem:[#allocation10 + $0x40] sm:$0xff]
          %v356 = vld [vmem:[#allocation10 + $0x48] sm:$0xff]
          %v357 = vld [vmem:[#allocation10 + $0x50] sm:$0xff]
          %v358 = vld [vmem:[#allocation10 + $0x58] sm:$0xff]
          %v359 = vld [vmem:[#allocation10 + $0x60] sm:$0xff]
          %v360 = vld [vmem:[#allocation10 + $0x68] sm:$0xff]
          %v361 = vld [vmem:[#allocation10 + $0x70] sm:$0xff]
          %v362 = vld [vmem:[#allocation10 + $0x78] sm:$0xff]
          %v363 = vld [vmem:[#allocation10 + $0x80] sm:$0xff]
          %v364 = vld [vmem:[#allocation10 + $0x88] sm:$0xff]
          %v365 = vld [vmem:[#allocation10 + $0x90] sm:$0xff]
          %v366 = vld [vmem:[#allocation10 + $0x98] sm:$0xff]
          %vm367 = vcmask 261120
          %v369 = vsel %vm367, %v346, 0
          %371 = vmatprep.subr.mxu0 0.0
          %372 = vmatpush1.msra.mxu0 0.0
          %373 = vmatprep.subr.mxu0 0.0
          %374 = vmatpush1.msra.mxu0 0.0
          %375 = vmatprep.subr.mxu0 0.0
          %376 = vmatpush1.msra.mxu0 0.0
          %377 = vmatprep.subr.mxu0 0.0
          %378 = vmatpush1.msra.mxu0 0.0
          %379 = vmatprep.subr.mxu0 0.0
          %380 = vmatpush1.msra.mxu0 0.0
          %381 = vmatprep.subr.mxu0 0.0
          %382 = vmatpush1.msra.mxu0 0.0
          %383 = vmatprep.subr.mxu0 0.0
          %384 = vmatpush1.msra.mxu0 0.0
          %385 = vmatprep.subr.mxu0 0.0
          %386 = vmatpush1.msra.mxu0 0.0
          %387 = vmatprep.subr.mxu0 0.0
          %388 = vmatpush1.msra.mxu0 0.0
          %389 = vmatprep.subr.mxu0 0.0
          %390 = vmatpush1.msra.mxu0 0.0
          %391 = vmatprep.subr.mxu0 0.0
          %392 = vmatpush1.msra.mxu0 0.0
          %393 = vmatprep.subr.mxu0 0.0
          %394 = vmatpush1.msra.mxu0 0.0
          %395 = vmatprep.subr.mxu0 %v363
          %396 = vmatpush1.msra.mxu0 %v362
          %397 = vmatprep.subr.mxu0 %v358
          %398 = vmatpush1.msra.mxu0 %v357
          %399 = vmatprep.subr.mxu0 %v353
          %400 = vmatpush1.msra.mxu0 %v352
          %401 = vmatprep.subr.mxu0 %v348
          %402 = vmatpush1.msra.mxu0 %v347
          %403 = vmatprep.subr.mxu0 0.0
          %404 = vmatpush2.msra.mxu0 0.0
          %405 = vmatprep.subr.mxu0 0.0
          %406 = vmatpush2.msra.mxu0 0.0
          %407 = vmatprep.subr.mxu0 0.0
          %408 = vmatpush2.msra.mxu0 0.0
          %409 = vmatprep.subr.mxu0 0.0
          %410 = vmatpush2.msra.mxu0 0.0
          %411 = vmatprep.subr.mxu0 0.0
          %412 = vmatpush2.msra.mxu0 0.0
          %413 = vmatprep.subr.mxu0 0.0
          %414 = vmatpush2.msra.mxu0 0.0
          %415 = vmatprep.subr.mxu0 0.0
          %416 = vmatpush2.msra.mxu0 0.0
          %417 = vmatprep.subr.mxu0 0.0
          %418 = vmatpush2.msra.mxu0 0.0
          %419 = vmatprep.subr.mxu0 0.0
          %420 = vmatpush2.msra.mxu0 0.0
          %421 = vmatprep.subr.mxu0 0.0
          %422 = vmatpush2.msra.mxu0 0.0
          %423 = vmatprep.subr.mxu0 0.0
          %424 = vmatpush2.msra.mxu0 0.0
          %425 = vmatprep.subr.mxu0 0.0
          %426 = vmatpush2.msra.mxu0 0.0
          %427 = vmatprep.subr.mxu0 0.0
          %428 = vmatpush2.msra.mxu0 0.0
          %429 = vmatprep.subr.mxu0 0.0
          %430 = vmatpush2.msra.mxu0 0.0
          %431 = vmatprep.subr.mxu0 0.0
          %432 = vmatpush2.msra.mxu0 0.0
          %433 = vmatprep.subr.mxu0 0.0
          %434 = vmatpush2.msra.mxu0 0.0
          %435 = vmatprep.mubr.f32.mxu0 0.0
          %436 = vmatmul.mubr.f32.gmra.mxu0 %v369
          %v437 = vpop.f32.mrf.mxu0
          %v438 = vadd.f32 0.0, %v437
          %v439 = vpop.f32.mrf.mxu0
          %v440 = vadd.f32 0.0, %v439
          %441 = vdwg.mxu0
          %442 = vmatprep.subr.mxu0 0.0
          %443 = vmatpush1.msra.mxu0 0.0
          %444 = vmatprep.subr.mxu0 0.0
          %445 = vmatpush1.msra.mxu0 0.0
          %446 = vmatprep.subr.mxu0 0.0
          %447 = vmatpush1.msra.mxu0 0.0
          %448 = vmatprep.subr.mxu0 0.0
          %449 = vmatpush1.msra.mxu0 0.0
          %450 = vmatprep.subr.mxu0 0.0
          %451 = vmatpush1.msra.mxu0 0.0
          %452 = vmatprep.subr.mxu0 0.0
          %453 = vmatpush1.msra.mxu0 0.0
          %454 = vmatprep.subr.mxu0 0.0
          %455 = vmatpush1.msra.mxu0 0.0
          %456 = vmatprep.subr.mxu0 0.0
          %457 = vmatpush1.msra.mxu0 0.0
          %458 = vmatprep.subr.mxu0 0.0
          %459 = vmatpush1.msra.mxu0 0.0
          %460 = vmatprep.subr.mxu0 0.0
          %461 = vmatpush1.msra.mxu0 0.0
          %462 = vmatprep.subr.mxu0 0.0
          %463 = vmatpush1.msra.mxu0 0.0
          %464 = vmatprep.subr.mxu0 0.0
          %465 = vmatpush1.msra.mxu0 0.0
          %466 = vmatprep.subr.mxu0 %v365
          %467 = vmatpush1.msra.mxu0 %v364
          %468 = vmatprep.subr.mxu0 %v360
          %469 = vmatpush1.msra.mxu0 %v359
          %470 = vmatprep.subr.mxu0 %v355
          %471 = vmatpush1.msra.mxu0 %v354
          %472 = vmatprep.subr.mxu0 %v350
          %473 = vmatpush1.msra.mxu0 %v349
          %474 = vmatprep.subr.mxu0 0.0
          %475 = vmatpush2.msra.mxu0 0.0
          %476 = vmatprep.subr.mxu0 0.0
          %477 = vmatpush2.msra.mxu0 0.0
          %478 = vmatprep.subr.mxu0 0.0
          %479 = vmatpush2.msra.mxu0 0.0
          %480 = vmatprep.subr.mxu0 0.0
          %481 = vmatpush2.msra.mxu0 0.0
          %482 = vmatprep.subr.mxu0 0.0
          %483 = vmatpush2.msra.mxu0 0.0
          %484 = vmatprep.subr.mxu0 0.0
          %485 = vmatpush2.msra.mxu0 0.0
          %486 = vmatprep.subr.mxu0 0.0
          %487 = vmatpush2.msra.mxu0 0.0
          %488 = vmatprep.subr.mxu0 0.0
          %489 = vmatpush2.msra.mxu0 0.0
          %490 = vmatprep.subr.mxu0 0.0
          %491 = vmatpush2.msra.mxu0 0.0
          %492 = vmatprep.subr.mxu0 0.0
          %493 = vmatpush2.msra.mxu0 0.0
          %494 = vmatprep.subr.mxu0 0.0
          %495 = vmatpush2.msra.mxu0 0.0
          %496 = vmatprep.subr.mxu0 0.0
          %497 = vmatpush2.msra.mxu0 0.0
          %498 = vmatprep.subr.mxu0 0.0
          %499 = vmatpush2.msra.mxu0 0.0
          %500 = vmatprep.subr.mxu0 0.0
          %501 = vmatpush2.msra.mxu0 0.0
          %502 = vmatprep.subr.mxu0 0.0
          %503 = vmatpush2.msra.mxu0 0.0
          %504 = vmatprep.subr.mxu0 0.0
          %505 = vmatpush2.msra.mxu0 0.0
          %506 = vmatprep.mubr.f32.mxu0 0.0
          %507 = vmatmul.mubr.f32.gmra.mxu0 %v369
          %v508 = vpop.f32.mrf.mxu0
          %v509 = vadd.f32 0.0, %v508
          %v510 = vpop.f32.mrf.mxu0
          %v511 = vadd.f32 0.0, %v510
          %512 = vdwg.mxu0
          %513 = vmatprep.subr.mxu0 0.0
          %514 = vmatpush1.msra.mxu0 0.0
          %515 = vmatprep.subr.mxu0 0.0
          %516 = vmatpush1.msra.mxu0 0.0
          %517 = vmatprep.subr.mxu0 0.0
          %518 = vmatpush1.msra.mxu0 0.0
          %519 = vmatprep.subr.mxu0 0.0
          %520 = vmatpush1.msra.mxu0 0.0
          %521 = vmatprep.subr.mxu0 0.0
          %522 = vmatpush1.msra.mxu0 0.0
          %523 = vmatprep.subr.mxu0 0.0
          %524 = vmatpush1.msra.mxu0 0.0
          %525 = vmatprep.subr.mxu0 0.0
          %526 = vmatpush1.msra.mxu0 0.0
          %527 = vmatprep.subr.mxu0 0.0
          %528 = vmatpush1.msra.mxu0 0.0
          %529 = vmatprep.subr.mxu0 0.0
          %530 = vmatpush1.msra.mxu0 0.0
          %531 = vmatprep.subr.mxu0 0.0
          %532 = vmatpush1.msra.mxu0 0.0
          %533 = vmatprep.subr.mxu0 0.0
          %534 = vmatpush1.msra.mxu0 0.0
          %535 = vmatprep.subr.mxu0 0.0
          %536 = vmatpush1.msra.mxu0 0.0
          %537 = vmatprep.subr.mxu0 0.0
          %538 = vmatpush1.msra.mxu0 %v366
          %539 = vmatprep.subr.mxu0 0.0
          %540 = vmatpush1.msra.mxu0 %v361
          %541 = vmatprep.subr.mxu0 0.0
          %542 = vmatpush1.msra.mxu0 %v356
          %543 = vmatprep.subr.mxu0 0.0
          %544 = vmatpush1.msra.mxu0 %v351
          %545 = vmatprep.subr.mxu0 0.0
          %546 = vmatpush2.msra.mxu0 0.0
          %547 = vmatprep.subr.mxu0 0.0
          %548 = vmatpush2.msra.mxu0 0.0
          %549 = vmatprep.subr.mxu0 0.0
          %550 = vmatpush2.msra.mxu0 0.0
          %551 = vmatprep.subr.mxu0 0.0
          %552 = vmatpush2.msra.mxu0 0.0
          %553 = vmatprep.subr.mxu0 0.0
          %554 = vmatpush2.msra.mxu0 0.0
          %555 = vmatprep.subr.mxu0 0.0
          %556 = vmatpush2.msra.mxu0 0.0
          %557 = vmatprep.subr.mxu0 0.0
          %558 = vmatpush2.msra.mxu0 0.0
          %559 = vmatprep.subr.mxu0 0.0
          %560 = vmatpush2.msra.mxu0 0.0
          %561 = vmatprep.subr.mxu0 0.0
          %562 = vmatpush2.msra.mxu0 0.0
          %563 = vmatprep.subr.mxu0 0.0
          %564 = vmatpush2.msra.mxu0 0.0
          %565 = vmatprep.subr.mxu0 0.0
          %566 = vmatpush2.msra.mxu0 0.0
          %567 = vmatprep.subr.mxu0 0.0
          %568 = vmatpush2.msra.mxu0 0.0
          %569 = vmatprep.subr.mxu0 0.0
          %570 = vmatpush2.msra.mxu0 0.0
          %571 = vmatprep.subr.mxu0 0.0
          %572 = vmatpush2.msra.mxu0 0.0
          %573 = vmatprep.subr.mxu0 0.0
          %574 = vmatpush2.msra.mxu0 0.0
          %575 = vmatprep.subr.mxu0 0.0
          %576 = vmatpush2.msra.mxu0 0.0
          %577 = vmatprep.mubr.f32.mxu0 0.0
          %578 = vmatmul.mubr.f32.gmra.mxu0 %v369
          %v579 = vpop.f32.mrf.mxu0
          %v580 = vadd.f32 0.0, %v579
          %v581 = vpop.f32.mrf.mxu0
          %582 = vdwg.mxu0
          %s583 = smul.u32 %s30, 5
          %s584 = smul.addr %s583, 8
          %s585 = scalar_lea.vmem [#allocation6], %s584
          %586 = vst [vmem:[%s585] sm:$0xff] %v438
          %587 = vst [vmem:[%s585 + $0x8] sm:$0xff] %v440
          %588 = vst [vmem:[%s585 + $0x10] sm:$0xff] %v509
          %589 = vst [vmem:[%s585 + $0x18] sm:$0xff] %v511
          %590 = vst [vmem:[%s585 + $0x20] sm:$0xff] %v580
          %v591 = vld [vmem:[#allocation2] sm:$0xf]
          %v592 = vrot.slane %v438, 4
          %v593 = vadd.f32 %v438, %v592
          %v594 = vrot.slane %v593, 2
          %v595 = vadd.f32 %v593, %v594
          %v596 = vrot.slane %v595, 1
          %v597 = vadd.f32 %v595, %v596
          %v598 = vrot.slane %v440, 4
          %v599 = vadd.f32 %v440, %v598
          %v600 = vrot.slane %v599, 2
          %v601 = vadd.f32 %v599, %v600
          %v602 = vrot.slane %v601, 1
          %v603 = vadd.f32 %v601, %v602
          %v604 = vrot.slane %v509, 4
          %v605 = vadd.f32 %v509, %v604
          %v606 = vrot.slane %v605, 2
          %v607 = vadd.f32 %v605, %v606
          %v608 = vrot.slane %v607, 1
          %v609 = vadd.f32 %v607, %v608
          %v610 = vrot.slane %v511, 4
          %v611 = vadd.f32 %v511, %v610
          %v612 = vrot.slane %v611, 2
          %v613 = vadd.f32 %v611, %v612
          %v614 = vrot.slane %v613, 1
          %v615 = vadd.f32 %v613, %v614
          %v620 = vcombine.low %v597, %v603
          %v621 = vcombine.low %v609, %v615
          %v623 = vunpack.c.l.s4 1966171168
          %v624 = vunpack.c.0.s8 %v623
          %v625 = vlaneseq
          %v626 = vshrl.u32 %v625, 7
          %v627 = vsub.s32 %v624, %v626
          %v628 = vrot.slane %v620, %v627
          %v630 = vunpack.c.l.s4 1966171168
          %v631 = vunpack.c.0.s8 %v630
          %v632 = vlaneseq
          %v633 = vshrl.u32 %v632, 7
          %v634 = vsub.s32 %v631, %v633
          %v635 = vrot.slane %v621, %v634
          %v636 = vcombine.low %v628, %v635
          %v638 = vunpack.c.l.s4 1966171168
          %v639 = vunpack.c.0.s8 %v638
          %v640 = vlaneseq
          %v641 = vshrl.u32 %v640, 7
          %v642 = vsub.s32 %v639, %v641
          %v643 = vrot.slane %v636, %v642
          %v645 = vadd.f32 %v591, %v643
          %v646 = vlaneseq
          %vm647 = vcmp.ge.s32.totalorder %v646, 0
          %vm648 = vcmp.lt.s32.totalorder %v646, 512
          %vm649 = vmand %vm647, %vm648
          %650 = vst.msk [vmem:[#allocation2] sm:$0xf] %vm649, %v645
          %v651 = vld [vmem:[#allocation3] sm:$0xf]
          %v652 = vmul.f32 %v438, %v438
          %v653 = vmul.f32 %v440, %v440
          %v654 = vmul.f32 %v509, %v509
          %v655 = vmul.f32 %v511, %v511
          %v656 = vrot.slane %v652, 4
          %v657 = vadd.f32 %v652, %v656
          %v658 = vrot.slane %v657, 2
          %v659 = vadd.f32 %v657, %v658
          %v660 = vrot.slane %v659, 1
          %v661 = vadd.f32 %v659, %v660
          %v662 = vrot.slane %v653, 4
          %v663 = vadd.f32 %v653, %v662
          %v664 = vrot.slane %v663, 2
          %v665 = vadd.f32 %v663, %v664
          %v666 = vrot.slane %v665, 1
          %v667 = vadd.f32 %v665, %v666
          %v668 = vrot.slane %v654, 4
          %v669 = vadd.f32 %v654, %v668
          %v670 = vrot.slane %v669, 2
          %v671 = vadd.f32 %v669, %v670
          %v672 = vrot.slane %v671, 1
          %v673 = vadd.f32 %v671, %v672
          %v674 = vrot.slane %v655, 4
          %v675 = vadd.f32 %v655, %v674
          %v676 = vrot.slane %v675, 2
          %v677 = vadd.f32 %v675, %v676
          %v678 = vrot.slane %v677, 1
          %v679 = vadd.f32 %v677, %v678
          %v684 = vcombine.low %v661, %v667
          %v685 = vcombine.low %v673, %v679
          %v687 = vunpack.c.l.s4 1966171168
          %v688 = vunpack.c.0.s8 %v687
          %v689 = vlaneseq
          %v690 = vshrl.u32 %v689, 7
          %v691 = vsub.s32 %v688, %v690
          %v692 = vrot.slane %v684, %v691
          %v694 = vunpack.c.l.s4 1966171168
          %v695 = vunpack.c.0.s8 %v694
          %v696 = vlaneseq
          %v697 = vshrl.u32 %v696, 7
          %v698 = vsub.s32 %v695, %v697
          %v699 = vrot.slane %v685, %v698
          %v700 = vcombine.low %v692, %v699
          %v702 = vunpack.c.l.s4 1966171168
          %v703 = vunpack.c.0.s8 %v702
          %v704 = vlaneseq
          %v705 = vshrl.u32 %v704, 7
          %v706 = vsub.s32 %v703, %v705
          %v707 = vrot.slane %v700, %v706
          %v709 = vadd.f32 %v651, %v707
          %710 = vst.msk [vmem:[#allocation3] sm:$0xf] %vm649, %v709
          // Predicated region
          $region69: #{tpu_custom_call.1} parent=63 // pred_check
            %p711 = pneg %p336
          $region70: #{tpu_custom_call.1} parent=63 // pred_check_branch
            %713 = sbr.rel (%p711) target = $region72
          $region71: #{tpu_custom_call.1} parent=63 // pred_region
            %v714 = vld [vmem:[#allocation2] sm:$0xf]
            %v715 = vmul.f32 %v714, 0.125
            %v716 = vld [vmem:[#allocation3] sm:$0xf]
            %v717 = vmul.f32 %v716, 0.125
            %v718 = vmul.f32 %v715, %v715
            %v719 = vsub.f32 %v717, %v718
            %v720 = vld [vmem:[#allocation12] sm:$0xf]
            %v721 = vadd.f32 %v719, 1e-05
            %v722 = vrsqrt.pop %v721
            %v723 = vmul.f32 %v720, %v722
            %724 = vst.msk [vmem:[#allocation4] sm:$0xf] %vm649, %v723
            %v725 = vld [vmem:[%s3] sm:$0xf]
            %v726 = vmul.f32 %v715, %v723
            %v727 = vsub.f32 %v725, %v726
            %728 = vst.msk [vmem:[#allocation5] sm:$0xf] %vm649, %v727
          $region72: #{tpu_custom_call.1} parent=63 // pred_fallthru
            _
        $region64: #{tpu_custom_call.1} parent=43 // pred_fallthru
          _
        %p729 = scmp.eq.s32.totalorder %s29, 1
        // Predicated region
        $region73: #{tpu_custom_call.1} parent=43 // pred_check
          %p730 = pneg %p729
        $region74: #{tpu_custom_call.1} parent=43 // pred_check_branch
          %732 = sbr.rel (%p730) target = $region76
        $region75: #{tpu_custom_call.1} parent=43 // pred_region
          %s733 = smul.u32 %s30, 5
          %s734 = smul.addr %s733, 8
          %s735 = scalar_lea.vmem [#allocation6], %s734
          %v736 = vld [vmem:[%s735] sm:$0xff]
          %v737 = vld [vmem:[%s735 + $0x8] sm:$0xff]
          %v738 = vld [vmem:[%s735 + $0x10] sm:$0xff]
          %v739 = vld [vmem:[%s735 + $0x18] sm:$0xff]
          %v740 = vld [vmem:[%s735 + $0x20] sm:$0xff]
          %v741 = vld [vmem:[#allocation4] sm:$0xf]
          %v743 = vlaneseq
          %v744 = vshrl.u32 %v743, 7
          %v745 = vsub.s32 0, %v744
          %v746 = vrot.slane %v741, %v745
          %v747 = vlaneseq
          %v748 = vshrl.u32 %v747, 7
          %v749 = vsub.s32 1, %v748
          %v750 = vrot.slane %v741, %v749
          %v751 = vlaneseq
          %v752 = vshrl.u32 %v751, 7
          %v753 = vsub.s32 2, %v752
          %v754 = vrot.slane %v741, %v753
          %v755 = vlaneseq
          %v756 = vshrl.u32 %v755, 7
          %v757 = vsub.s32 3, %v756
          %v758 = vrot.slane %v741, %v757
          %v763 = vmul.f32 %v736, %v746
          %v764 = vmul.f32 %v737, %v750
          %v765 = vmul.f32 %v738, %v754
          %v766 = vmul.f32 %v739, %v758
          %v767 = vld [vmem:[#allocation5] sm:$0xf]
          %v769 = vlaneseq
          %v770 = vshrl.u32 %v769, 7
          %v771 = vsub.s32 0, %v770
          %v772 = vrot.slane %v767, %v771
          %v773 = vlaneseq
          %v774 = vshrl.u32 %v773, 7
          %v775 = vsub.s32 1, %v774
          %v776 = vrot.slane %v767, %v775
          %v777 = vlaneseq
          %v778 = vshrl.u32 %v777, 7
          %v779 = vsub.s32 2, %v778
          %v780 = vrot.slane %v767, %v779
          %v781 = vlaneseq
          %v782 = vshrl.u32 %v781, 7
          %v783 = vsub.s32 3, %v782
          %v784 = vrot.slane %v767, %v783
          %v789 = vadd.f32 %v763, %v772
          %v790 = vadd.f32 %v764, %v776
          %v791 = vadd.f32 %v765, %v780
          %v792 = vadd.f32 %v766, %v784
          %v793 = vmax.f32 %v789, 0.0
          %v794 = vmax.f32 %v790, 0.0
          %v795 = vmax.f32 %v791, 0.0
          %v796 = vmax.f32 %v792, 0.0
          %v797 = vld [vmem:[#allocation13] sm:$0xff]
          %v798 = vld [vmem:[#allocation13 + $0x8] sm:$0xff]
          %v799 = vld [vmem:[#allocation13 + $0x10] sm:$0xff]
          %v800 = vld [vmem:[#allocation13 + $0x18] sm:$0xff]
          %v801 = vld [vmem:[#allocation13 + $0x20] sm:$0xff]
          %v802 = vld [vmem:[#allocation13 + $0x28] sm:$0xff]
          %v803 = vld [vmem:[#allocation13 + $0x30] sm:$0xff]
          %v804 = vld [vmem:[#allocation13 + $0x38] sm:$0xff]
          %v805 = vld [vmem:[#allocation13 + $0x40] sm:$0xff]
          %v806 = vld [vmem:[#allocation13 + $0x48] sm:$0xff]
          %v807 = vld [vmem:[#allocation13 + $0x50] sm:$0xff]
          %v808 = vld [vmem:[#allocation13 + $0x58] sm:$0xff]
          %v809 = vld [vmem:[#allocation13 + $0x60] sm:$0xff]
          %v810 = vld [vmem:[#allocation13 + $0x68] sm:$0xff]
          %v811 = vld [vmem:[#allocation13 + $0x70] sm:$0xff]
          %v812 = vld [vmem:[#allocation13 + $0x78] sm:$0xff]
          %v813 = vld [vmem:[#allocation13 + $0x80] sm:$0xff]
          %v814 = vld [vmem:[#allocation13 + $0x88] sm:$0xff]
          %v815 = vld [vmem:[#allocation13 + $0x90] sm:$0xff]
          %v816 = vld [vmem:[#allocation13 + $0x98] sm:$0xff]
          %v817 = vld [vmem:[#allocation13 + $0xa0] sm:$0xff]
          %v818 = vld [vmem:[#allocation13 + $0xa8] sm:$0xff]
          %v819 = vld [vmem:[#allocation13 + $0xb0] sm:$0xff]
          %v820 = vld [vmem:[#allocation13 + $0xb8] sm:$0xff]
          %v821 = vld [vmem:[#allocation13 + $0xc0] sm:$0xff]
          %v822 = vld [vmem:[#allocation13 + $0xc8] sm:$0xff]
          %v823 = vld [vmem:[#allocation13 + $0xd0] sm:$0xff]
          %v824 = vld [vmem:[#allocation13 + $0xd8] sm:$0xff]
          %v825 = vld [vmem:[#allocation13 + $0xe0] sm:$0xff]
          %v826 = vld [vmem:[#allocation13 + $0xe8] sm:$0xff]
          %v827 = vld [vmem:[#allocation13 + $0xf0] sm:$0xff]
          %v828 = vld [vmem:[#allocation13 + $0xf8] sm:$0xff]
          %v829 = vld [vmem:[#allocation13 + $0x100] sm:$0xff]
          %v830 = vld [vmem:[#allocation13 + $0x108] sm:$0xff]
          %v831 = vld [vmem:[#allocation13 + $0x110] sm:$0xff]
          %v832 = vld [vmem:[#allocation13 + $0x118] sm:$0xff]
          %v833 = vld [vmem:[#allocation13 + $0x120] sm:$0xff]
          %v834 = vld [vmem:[#allocation13 + $0x128] sm:$0xff]
          %v835 = vld [vmem:[#allocation13 + $0x130] sm:$0xff]
          %v836 = vld [vmem:[#allocation13 + $0x138] sm:$0xff]
          %v837 = vld [vmem:[#allocation13 + $0x140] sm:$0xff]
          %v838 = vld [vmem:[#allocation13 + $0x148] sm:$0xff]
          %v839 = vld [vmem:[#allocation13 + $0x150] sm:$0xff]
          %v840 = vld [vmem:[#allocation13 + $0x158] sm:$0xff]
          %v841 = vld [vmem:[#allocation13 + $0x160] sm:$0xff]
          %v842 = vld [vmem:[#allocation13 + $0x168] sm:$0xff]
          %v843 = vld [vmem:[#allocation13 + $0x170] sm:$0xff]
          %v844 = vld [vmem:[#allocation13 + $0x178] sm:$0xff]
          %v845 = vld [vmem:[#allocation13 + $0x180] sm:$0xff]
          %v846 = vld [vmem:[#allocation13 + $0x188] sm:$0xff]
          %v847 = vld [vmem:[#allocation13 + $0x190] sm:$0xff]
          %v848 = vld [vmem:[#allocation13 + $0x198] sm:$0xff]
          %v849 = vld [vmem:[#allocation13 + $0x1a0] sm:$0xff]
          %v850 = vld [vmem:[#allocation13 + $0x1a8] sm:$0xff]
          %v851 = vld [vmem:[#allocation13 + $0x1b0] sm:$0xff]
          %v852 = vld [vmem:[#allocation13 + $0x1b8] sm:$0xff]
          %v853 = vld [vmem:[#allocation13 + $0x1c0] sm:$0xff]
          %v854 = vld [vmem:[#allocation13 + $0x1c8] sm:$0xff]
          %v855 = vld [vmem:[#allocation13 + $0x1d0] sm:$0xff]
          %v856 = vld [vmem:[#allocation13 + $0x1d8] sm:$0xff]
          %v857 = vld [vmem:[#allocation13 + $0x1e0] sm:$0xff]
          %v858 = vld [vmem:[#allocation13 + $0x1e8] sm:$0xff]
          %v859 = vld [vmem:[#allocation13 + $0x1f0] sm:$0xff]
          %v860 = vld [vmem:[#allocation13 + $0x1f8] sm:$0xff]
          %v861 = vld [vmem:[%s5] sm:$0x1]
          %v863 = vlaneseq
          %v864 = vshrl.u32 %v863, 7
          %v865 = vsub.s32 0, %v864
          %v866 = vrot.slane %v861, %v865
          %868 = vmatprep.subr.mxu0 0.0
          %869 = vmatpush1.msra.mxu0 %v812
          %870 = vmatprep.subr.mxu0 0.0
          %871 = vmatpush1.msra.mxu0 %v811
          %872 = vmatprep.subr.mxu0 0.0
          %873 = vmatpush1.msra.mxu0 %v810
          %874 = vmatprep.subr.mxu0 0.0
          %875 = vmatpush1.msra.mxu0 %v809
          %876 = vmatprep.subr.mxu0 0.0
          %877 = vmatpush1.msra.mxu0 %v808
          %878 = vmatprep.subr.mxu0 0.0
          %879 = vmatpush1.msra.mxu0 %v807
          %880 = vmatprep.subr.mxu0 0.0
          %881 = vmatpush1.msra.mxu0 %v806
          %882 = vmatprep.subr.mxu0 0.0
          %883 = vmatpush1.msra.mxu0 %v805
          %884 = vmatprep.subr.mxu0 0.0
          %885 = vmatpush1.msra.mxu0 %v804
          %886 = vmatprep.subr.mxu0 0.0
          %887 = vmatpush1.msra.mxu0 %v803
          %888 = vmatprep.subr.mxu0 0.0
          %889 = vmatpush1.msra.mxu0 %v802
          %890 = vmatprep.subr.mxu0 0.0
          %891 = vmatpush1.msra.mxu0 %v801
          %892 = vmatprep.subr.mxu0 0.0
          %893 = vmatpush1.msra.mxu0 %v800
          %894 = vmatprep.subr.mxu0 0.0
          %895 = vmatpush1.msra.mxu0 %v799
          %896 = vmatprep.subr.mxu0 0.0
          %897 = vmatpush1.msra.mxu0 %v798
          %898 = vmatprep.subr.mxu0 0.0
          %899 = vmatpush1.msra.mxu0 %v797
          %900 = vmatprep.subr.mxu0 0.0
          %901 = vmatpush2.msra.mxu0 %v828
          %902 = vmatprep.subr.mxu0 0.0
          %903 = vmatpush2.msra.mxu0 %v827
          %904 = vmatprep.subr.mxu0 0.0
          %905 = vmatpush2.msra.mxu0 %v826
          %906 = vmatprep.subr.mxu0 0.0
          %907 = vmatpush2.msra.mxu0 %v825
          %908 = vmatprep.subr.mxu0 0.0
          %909 = vmatpush2.msra.mxu0 %v824
          %910 = vmatprep.subr.mxu0 0.0
          %911 = vmatpush2.msra.mxu0 %v823
          %912 = vmatprep.subr.mxu0 0.0
          %913 = vmatpush2.msra.mxu0 %v822
          %914 = vmatprep.subr.mxu0 0.0
          %915 = vmatpush2.msra.mxu0 %v821
          %916 = vmatprep.subr.mxu0 0.0
          %917 = vmatpush2.msra.mxu0 %v820
          %918 = vmatprep.subr.mxu0 0.0
          %919 = vmatpush2.msra.mxu0 %v819
          %920 = vmatprep.subr.mxu0 0.0
          %921 = vmatpush2.msra.mxu0 %v818
          %922 = vmatprep.subr.mxu0 0.0
          %923 = vmatpush2.msra.mxu0 %v817
          %924 = vmatprep.subr.mxu0 0.0
          %925 = vmatpush2.msra.mxu0 %v816
          %926 = vmatprep.subr.mxu0 0.0
          %927 = vmatpush2.msra.mxu0 %v815
          %928 = vmatprep.subr.mxu0 0.0
          %929 = vmatpush2.msra.mxu0 %v814
          %930 = vmatprep.subr.mxu0 0.0
          %931 = vmatpush2.msra.mxu0 %v813
          %932 = vmatprep.mubr.f32.mxu0 %v794
          %933 = vmatmul.mubr.f32.gmra.mxu0 %v793
          %v934 = vpop.f32.mrf.mxu0
          %v935 = vadd.f32 %v866, %v934
          %v936 = vpop.f32.mrf.mxu0
          %937 = vdwg.mxu0
          %938 = vmatprep.subr.mxu0 0.0
          %939 = vmatpush1.msra.mxu0 %v844
          %940 = vmatprep.subr.mxu0 0.0
          %941 = vmatpush1.msra.mxu0 %v843
          %942 = vmatprep.subr.mxu0 0.0
          %943 = vmatpush1.msra.mxu0 %v842
          %944 = vmatprep.subr.mxu0 0.0
          %945 = vmatpush1.msra.mxu0 %v841
          %946 = vmatprep.subr.mxu0 0.0
          %947 = vmatpush1.msra.mxu0 %v840
          %948 = vmatprep.subr.mxu0 0.0
          %949 = vmatpush1.msra.mxu0 %v839
          %950 = vmatprep.subr.mxu0 0.0
          %951 = vmatpush1.msra.mxu0 %v838
          %952 = vmatprep.subr.mxu0 0.0
          %953 = vmatpush1.msra.mxu0 %v837
          %954 = vmatprep.subr.mxu0 0.0
          %955 = vmatpush1.msra.mxu0 %v836
          %956 = vmatprep.subr.mxu0 0.0
          %957 = vmatpush1.msra.mxu0 %v835
          %958 = vmatprep.subr.mxu0 0.0
          %959 = vmatpush1.msra.mxu0 %v834
          %960 = vmatprep.subr.mxu0 0.0
          %961 = vmatpush1.msra.mxu0 %v833
          %962 = vmatprep.subr.mxu0 0.0
          %963 = vmatpush1.msra.mxu0 %v832
          %964 = vmatprep.subr.mxu0 0.0
          %965 = vmatpush1.msra.mxu0 %v831
          %966 = vmatprep.subr.mxu0 0.0
          %967 = vmatpush1.msra.mxu0 %v830
          %968 = vmatprep.subr.mxu0 0.0
          %969 = vmatpush1.msra.mxu0 %v829
          %970 = vmatprep.subr.mxu0 0.0
          %971 = vmatpush2.msra.mxu0 %v860
          %972 = vmatprep.subr.mxu0 0.0
          %973 = vmatpush2.msra.mxu0 %v859
          %974 = vmatprep.subr.mxu0 0.0
          %975 = vmatpush2.msra.mxu0 %v858
          %976 = vmatprep.subr.mxu0 0.0
          %977 = vmatpush2.msra.mxu0 %v857
          %978 = vmatprep.subr.mxu0 0.0
          %979 = vmatpush2.msra.mxu0 %v856
          %980 = vmatprep.subr.mxu0 0.0
          %981 = vmatpush2.msra.mxu0 %v855
          %982 = vmatprep.subr.mxu0 0.0
          %983 = vmatpush2.msra.mxu0 %v854
          %984 = vmatprep.subr.mxu0 0.0
          %985 = vmatpush2.msra.mxu0 %v853
          %986 = vmatprep.subr.mxu0 0.0
          %987 = vmatpush2.msra.mxu0 %v852
          %988 = vmatprep.subr.mxu0 0.0
          %989 = vmatpush2.msra.mxu0 %v851
          %990 = vmatprep.subr.mxu0 0.0
          %991 = vmatpush2.msra.mxu0 %v850
          %992 = vmatprep.subr.mxu0 0.0
          %993 = vmatpush2.msra.mxu0 %v849
          %994 = vmatprep.subr.mxu0 0.0
          %995 = vmatpush2.msra.mxu0 %v848
          %996 = vmatprep.subr.mxu0 0.0
          %997 = vmatpush2.msra.mxu0 %v847
          %998 = vmatprep.subr.mxu0 0.0
          %999 = vmatpush2.msra.mxu0 %v846
          %1000 = vmatprep.subr.mxu0 0.0
          %1001 = vmatpush2.msra.mxu0 %v845
          %1002 = vmatprep.mubr.f32.mxu0 %v796
          %1003 = vmatmul.mubr.f32.gmra.mxu0 %v795
          %v1004 = vpop.f32.mrf.mxu0
          %v1005 = vadd.f32 %v935, %v1004
          %v1006 = vpop.f32.mrf.mxu0
          %1007 = vdwg.mxu0
          %v1008 = vadd.f32 %v1005, %v740
          %1009 = vst [vmem:[%s328] sm:$0xff] %v1008
        $region76: #{tpu_custom_call.1} parent=43 // pred_fallthru
          _
        %s1010 = sand.u32 %s182, 1
        %s1011 = scalar_lea.sflag [#allocation9], %s1010
        %s1012 = sand.u32 %s182, 1
        %s1013 = smul.addr %s1012, 8
        %s1014 = scalar_lea.vmem [#allocation15], %s1013
        // Predicated region
        $region77: #{tpu_custom_call.1} parent=43 // pred_check
          %p1015 = pneg %p192
        $region78: #{tpu_custom_call.1} parent=43 // pred_check_branch
          %1017 = sbr.rel (%p1015) target = $region80
        $region79: #{tpu_custom_call.1} parent=43 // pred_region
          %s1018 = smul.u32 %s30, %s29
          %s1020 = ssub.s32 128, 128
          %1021 = vsyncadd %s1011, %s1020
          %s1022 = smul.addr %s1018, 128
          %s1023 = scalar_lea.hbm %s6, %s1022
          %s1025 = sshll.u32 %s1014, 4
          %s1026 = int_to_ptr.vmem [resolvable:$true] %s1025
          %1028 = dma.vmem_to_hbm [thread:$0]  %s1026, 128, %s1023, %s1011
        $region80: #{tpu_custom_call.1} parent=43 // pred_fallthru
          _
      $region44: #{tpu_custom_call.1} parent=5 // pred_fallthru
        _
      %p1029 = scmp.le.s32.totalorder 2, %s20
      // Predicated region
      $region81: #{tpu_custom_call.1} parent=5 // pred_check
        %p1030 = pneg %p1029
      $region82: #{tpu_custom_call.1} parent=5 // pred_check_branch
        %1032 = sbr.rel (%p1030) target = $region84
      $region83: #{tpu_custom_call.1} parent=5 // pred_region
        %s1033 = ssub.s32 %s20, 2
        // Predicated region
        $region85: #{tpu_custom_call.1} parent=83 // pred_check
          %p1034 = pneg %p198
        $region86: #{tpu_custom_call.1} parent=83 // pred_check_branch
          %1036 = sbr.rel (%p1034) target = $region88
        $region87: #{tpu_custom_call.1} parent=83 // pred_region
          %s1037 = sand.u32 %s183, 1
          %s1038 = scalar_lea.sflag [#allocation9], %s1037
          %s1039 = sand.u32 %s183, 1
          %s1040 = smul.addr %s1039, 8
          %s1041 = scalar_lea.vmem [#allocation15], %s1040
          %1042 = dma.done %s1038, 128
        $region88: #{tpu_custom_call.1} parent=83 // pred_fallthru
          _
      $region84: #{tpu_custom_call.1} parent=5 // pred_fallthru
        _
    $region6: #{tpu_custom_call.1} parent=1 // loop_footer
      %s24 = sadd.s32 1, %s20
    $region7: #{tpu_custom_call.1} parent=1 // loop_footer_branch
      %19 = sbr.rel target = $region3
    $region8: #{tpu_custom_call.1} parent=1 // loop_exit
      _
    %1043 = vsyncpa [#allocation8], 1
    %s1044 = scalar_lea.sflag [#allocation8], 1
    %1045 = vsyncpa %s1044, 1
    %1046 = vsyncpa [#allocation11], 1
    %1047 = vsyncpa [#allocation14], 1
    %1048 = vsyncpa [#allocation9], 1
    %s1049 = scalar_lea.sflag [#allocation9], 1
    %1050 = vsyncpa %s1049, 1

</llo_original>
